<compile_context>
chip_gen: v7x
topology: tpu7x:2x2x1
jax: 0.10.0
libtpu: 0.0.40
codegen_flags: <defaults>
</compile_context>

<pallas_src>
import functools

import jax
import jax.numpy as jnp
from jax.experimental import pallas as pl
from jax.experimental.pallas import tpu as pltpu


def _conv_matmul_bn_kernel(*refs, relu, sc_channels, sc_offset):
    """One lane-tile of  out = [relu]( W_scaled @ cols + bias [+ shortcut] ).

    Refs per grid step:
      cols_ref : (Kp, T)    bf16 im2col columns (K = 9*Cin zero-padded to Kp,
                            lanes = flattened batch*spatial tile)
      w_ref    : (Cout, Kp) bf16 conv weights with the BN scale folded in
      bias_ref : (Cout, 1)  f32 folded BN bias
      sc_ref   : (C_sc, T)  bf16 residual (optional, added at channel sc_offset)
      o_ref    : (Cout, T)  bf16 output
    """
    if sc_channels:
        cols_ref, w_ref, bias_ref, sc_ref, o_ref = refs
    else:
        cols_ref, w_ref, bias_ref, o_ref = refs
        sc_ref = None

    cout = o_ref.shape[0]

    # Single bf16 MXU matmul, f32 accumulation.
    acc = jnp.dot(w_ref[...], cols_ref[...],
                  preferred_element_type=jnp.float32)            # (Cout, T) f32
    out = acc + bias_ref[...]                                    # folded BN bias

    if sc_channels:
        sc = sc_ref[...].astype(jnp.float32)                     # (C_sc, T)
        if sc_channels == cout and sc_offset == 0:
            out = out + sc                                       # identity shortcut
        else:
            # Option-A shortcut: add only onto the [sc_offset, sc_offset+C_sc)
            # channel band; the implicit zero padding costs nothing (no zeros
            # tensor, no full-width add).
            lo, hi = sc_offset, sc_offset + sc_channels
            pieces = []
            if lo > 0:
                pieces.append(out[:lo, :])
            pieces.append(out[lo:hi, :] + sc)
            if hi < cout:
                pieces.append(out[hi:, :])
            out = jnp.concatenate(pieces, axis=0)

    if relu:
        out = jnp.maximum(out, 0.0)

    o_ref[...] = out.astype(o_ref.dtype)


def _pick_lane_tile(total):
    """Largest lane tile (multiple of 128, capped at 2048 for the v7x VMEM
    budget) that divides `total`, preferring >= 2 grid steps (v7x 2 TCs)."""
    for t in (2048, 1024, 512, 256, 128):
        if total % t == 0 and total // t >= 2:
            return t
    return total  # tiny problems: one lane-dense step over everything


def conv3x3_bn_act(x_nchw, w_oihw, bn_scale, bn_bias, *, stride, relu,
                   shortcut=None, shortcut_offset=0, out_dtype=jnp.bfloat16):
    """3x3 conv (pad=1, bias=False) + folded-BN affine (+ residual) (+ ReLU).

    Input NCHW / weights OIHW; returns NCHW in `out_dtype` (bf16 by default).
    """
    N, Cin, H, W = x_nchw.shape
    Cout = w_oihw.shape[0]
    s = stride
    Ho = (H + 2 - 3) // s + 1
    Wo = (W + 2 - 3) // s + 1
    HW = Ho * Wo
    L = N * HW                      # lane axis = flattened batch * spatial

    # im2col in bf16 (cast BEFORE the 9x expansion so only bf16 hits HBM):
    # cols[(kh*3+kw)*Cin + c, n*HW + y*Wo + x] = x_pad[n, c, y*s+kh, x*s+kw]
    x_pad = jnp.pad(x_nchw.astype(jnp.bfloat16), ((0, 0), (0, 0), (1, 1), (1, 1)))
    taps = []
    for kh in range(3):
        for kw in range(3):
            taps.append(x_pad[:, :,
                              kh:kh + (Ho - 1) * s + 1:s,
                              kw:kw + (Wo - 1) * s + 1:s])        # (N, Cin, Ho, Wo)
    cols = jnp.stack(taps, axis=0)                                # (9, N, Cin, Ho, Wo)
    cols = jnp.transpose(cols, (0, 2, 1, 3, 4)).reshape(9 * Cin, L)

    # Weights OIHW -> (Cout, kh, kw, Cin) -> (Cout, 9*Cin); fold BN scale in f32.
    w_t = jnp.transpose(w_oihw, (0, 2, 3, 1)).reshape(Cout, 9 * Cin)
    w_t = w_t.astype(jnp.float32) * bn_scale.reshape(Cout, 1).astype(jnp.float32)

    # Pad K to a multiple of 16 for bf16 sublane packing.
    K = 9 * Cin
    Kp = -(-K // 16) * 16
    if Kp != K:
        cols = jnp.pad(cols, ((0, Kp - K), (0, 0)))
        w_t = jnp.pad(w_t, ((0, 0), (0, Kp - K)))
    w_t = w_t.astype(jnp.bfloat16)
    bias2 = bn_bias.reshape(Cout, 1).astype(jnp.float32)

    lane_t = _pick_lane_tile(L)
    grid = (L // lane_t,)

    in_specs = [
        pl.BlockSpec((Kp, lane_t), lambda t: (0, t)),
        pl.BlockSpec((Cout, Kp), lambda t: (0, 0)),
        pl.BlockSpec((Cout, 1), lambda t: (0, 0)),
    ]
    args = [cols, w_t, bias2]

    sc_channels = 0
    if shortcut is not None:
        sc_channels = shortcut.shape[1]
        # Same (C, N*HW) lane layout as the output; carried in bf16.
        sc_flat = jnp.transpose(shortcut, (1, 0, 2, 3)).reshape(sc_channels, L)
        sc_flat = sc_flat.astype(jnp.bfloat16)
        in_specs.append(pl.BlockSpec((sc_channels, lane_t), lambda t: (0, t)))
        args.append(sc_flat)

    kernel = functools.partial(_conv_matmul_bn_kernel, relu=relu,
                               sc_channels=sc_channels, sc_offset=shortcut_offset)
    out_flat = pl.pallas_call(
        kernel,
        out_shape=jax.ShapeDtypeStruct((Cout, L), out_dtype),
        grid=grid,
        in_specs=in_specs,
        out_specs=pl.BlockSpec((Cout, lane_t), lambda t: (0, t)),
        compiler_params=pltpu.CompilerParams(
            dimension_semantics=("parallel",),
            vmem_limit_bytes=32 * 1024 * 1024),
    )(*args)

    # (Cout, N*HW) -> (N, Cout, Ho, Wo)
    return jnp.transpose(out_flat.reshape(Cout, N, Ho, Wo), (1, 0, 2, 3))


def init_basic_block_prune_params(key, in_planes, cfg):
    """Deterministic synthetic parameters matching the nn.Module's shapes."""
    ks = jax.random.split(key, 10)
    f32 = jnp.float32
    return {
        # conv weights in PyTorch OIHW layout
        "conv1_w": jax.random.normal(ks[0], (cfg, in_planes, 3, 3), f32) * 0.2,
        "bn1_gamma": 1.0 + 0.1 * jax.random.normal(ks[1], (cfg,), f32),
        "bn1_beta": 0.1 * jax.random.normal(ks[2], (cfg,), f32),
        "bn1_mean": 0.1 * jax.random.normal(ks[3], (cfg,), f32),
        "bn1_var": 0.5 + jax.nn.softplus(jax.random.normal(ks[4], (cfg,), f32)),
        "conv2_w": jax.random.normal(ks[5], (cfg, cfg, 3, 3), f32) * 0.2,
        "bn2_gamma": 1.0 + 0.1 * jax.random.normal(ks[6], (cfg,), f32),
        "bn2_beta": 0.1 * jax.random.normal(ks[7], (cfg,), f32),
        "bn2_mean": 0.1 * jax.random.normal(ks[8], (cfg,), f32),
        "bn2_var": 0.5 + jax.nn.softplus(jax.random.normal(ks[9], (cfg,), f32)),
    }


def basic_block_prune_forward(params, x_nchw, *, block_id, counter,
                              in_planes, planes, stride=1, option="A", eps=1e-5):
    """Forward of BasicBlockPrune.  Returns (out_NCHW, net_signals dict).

    Note: as in the PyTorch module, the residual add requires the conv2 width
    (cfg) to match the shortcut's channel count (planes for the option-A
    downsample path, in_planes for the identity path).
    """
    net_signals = {}

    # conv1 + bn1 + relu  (BN folded: scale = g/sqrt(v+eps), bias = b - m*scale)
    scale1 = params["bn1_gamma"] / jnp.sqrt(params["bn1_var"] + eps)
    bias1 = params["bn1_beta"] - params["bn1_mean"] * scale1
    out1 = conv3x3_bn_act(x_nchw, params["conv1_w"], scale1, bias1,
                          stride=stride, relu=True)
    net_signals[f"layer{block_id}.{counter}.conv1"] = out1   # NCHW

    # shortcut
    if stride != 1 or in_planes != planes:
        if option == "A":
            # F.pad(x[:, :, ::2, ::2], (0,0,0,0, planes//4, planes//4)); the
            # channel zero-pad is a sliced band-add inside kernel 2.
            sc = x_nchw[:, :, ::2, ::2]
            sc_offset = planes // 4
        else:
            # TODO(synk): option 'B' (1x1 conv + BN shortcut) not wired up here.
            raise NotImplementedError("only option 'A' shortcut implemented")
    else:
        sc = x_nchw
        sc_offset = 0

    # conv2 + bn2 + residual add + relu (fused)
    scale2 = params["bn2_gamma"] / jnp.sqrt(params["bn2_var"] + eps)
    bias2 = params["bn2_beta"] - params["bn2_mean"] * scale2
    out2 = conv3x3_bn_act(out1, params["conv2_w"], scale2, bias2,
                          stride=1, relu=True,
                          shortcut=sc, shortcut_offset=sc_offset)
    net_signals[f"layer{block_id}.{counter}.conv2"] = out2

    return out2, net_signals


# ---------------- pure-JAX reference (for correctness check only) ----------------
def _ref_forward(params, x_nchw, *, in_planes, planes, stride, eps=1e-5):
    def conv(x, w, s):
        return jax.lax.conv_general_dilated(
            x, w, (s, s), ((1, 1), (1, 1)),
            dimension_numbers=("NCHW", "OIHW", "NCHW"))

    def bn(x, g, b, m, v):
        g, b, m, v = (t[None, :, None, None] for t in (g, b, m, v))
        return (x - m) / jnp.sqrt(v + eps) * g + b

    out = jax.nn.relu(bn(conv(x_nchw, params["conv1_w"], stride),
                         params["bn1_gamma"], params["bn1_beta"],
                         params["bn1_mean"], params["bn1_var"]))
    out = bn(conv(out, params["conv2_w"], 1),
             params["bn2_gamma"], params["bn2_beta"],
             params["bn2_mean"], params["bn2_var"])
    if stride != 1 or in_planes != planes:
        sc = x_nchw[:, :, ::2, ::2]
        sc = jnp.pad(sc, ((0, 0), (planes // 4, planes // 4), (0, 0), (0, 0)))
    else:
        sc = x_nchw
    return jax.nn.relu(out + sc)


if __name__ == "__main__":
    key = jax.random.PRNGKey(0)
    k_x, k_p, k_x2, k_p2 = jax.random.split(key, 4)

    # --- Test 1: downsampling block (stride=2, option-A shortcut) ---
    # in_planes=4 -> planes=8, pruned width cfg=8 (== planes for the residual add).
    N, in_planes, H, W = 2, 4, 16, 16
    planes, cfg, stride = 8, 8, 2

    x = jax.random.normal(k_x, (N, in_planes, H, W), jnp.float32)
    params = init_basic_block_prune_params(k_p, in_planes, cfg)

    out, net_signals = basic_block_prune_forward(
        params, x, block_id=1, counter=0,
        in_planes=in_planes, planes=planes, stride=stride, option="A")
    out = jax.block_until_ready(out)

    assert out.shape == (N, cfg, H // stride, W // stride), out.shape
    assert set(net_signals) == {"layer1.0.conv1", "layer1.0.conv2"}

    ref = _ref_forward(params, x, in_planes=in_planes, planes=planes, stride=stride)
    # bf16 matmul operands + bf16 activation storage (f32 accumulation) ->
    # loosened tolerance vs the f32 reference.
    err = float(jnp.abs(out.astype(jnp.float32) - ref).max())
    assert jnp.allclose(out.astype(jnp.float32), ref, atol=1e-1, rtol=1e-1), err

    # --- Test 2: identity block (stride=1, in_planes == planes == cfg) ---
    in2 = 8
    x2 = jax.random.normal(k_x2, (N, in2, H, W), jnp.float32)
    params2 = init_basic_block_prune_params(k_p2, in2, in2)
    out2, sigs2 = basic_block_prune_forward(
        params2, x2, block_id=2, counter=1,
        in_planes=in2, planes=in2, stride=1, option="A")
    out2 = jax.block_until_ready(out2)
    assert out2.shape == (N, in2, H, W), out2.shape
    assert set(sigs2) == {"layer2.1.conv1", "layer2.1.conv2"}
    ref2 = _ref_forward(params2, x2, in_planes=in2, planes=in2, stride=1)
    err2 = float(jnp.abs(out2.astype(jnp.float32) - ref2).max())
    assert jnp.allclose(out2.astype(jnp.float32), ref2, atol=1e-1, rtol=1e-1), err2

    print("KERNEL_OK")
</pallas_src>

<mosaic_0001>
module attributes {stable_mosaic.version = 11 : i64} {
  func.func @_conv_matmul_bn_kernel(%arg0: i32, %arg1: memref<48x128xbf16, #tpu.memory_space<vmem>>, %arg2: memref<8x48xbf16, #tpu.memory_space<vmem>>, %arg3: memref<8x1xf32, #tpu.memory_space<vmem>>, %arg4: memref<8x128xbf16, #tpu.memory_space<vmem>>) attributes {dimension_semantics = [#tpu.dimension_semantics<parallel>], iteration_bounds = array<i64: 1>, scalar_prefetch = 0 : i64, scratch_operands = 0 : i64, tpu.core_type = #tpu.core_type<tc>, window_params = [{transform_indices = @transform_0, window_bounds = array<i64: 48, 128>}, {pipeline_mode = #tpu.pipeline_mode<synchronous>, transform_indices = @transform_1, window_bounds = array<i64: 8, 48>}, {pipeline_mode = #tpu.pipeline_mode<synchronous>, transform_indices = @transform_2, window_bounds = array<i64: 8, 1>}, {transform_indices = @transform_3, window_bounds = array<i64: 8, 128>}]} {
    %c0 = arith.constant 0 : index
    %c0_0 = arith.constant 0 : index
    %0 = vector.load %arg2[%c0, %c0_0] : memref<8x48xbf16, #tpu.memory_space<vmem>>, vector<8x48xbf16>
    %c0_1 = arith.constant 0 : index
    %c0_2 = arith.constant 0 : index
    %1 = vector.load %arg1[%c0_1, %c0_2] : memref<48x128xbf16, #tpu.memory_space<vmem>>, vector<48x128xbf16>
    %cst = arith.constant dense<0.000000e+00> : vector<8x128xf32>
    %2 = tpu.matmul %0, %1, %cst {dimension_numbers = #tpu.dot_dimension_numbers<[1], [0], [0], [1], [0, 0, 1, 1], [], []>} : vector<8x48xbf16>, vector<48x128xbf16>, vector<8x128xf32> -> vector<8x128xf32>
    %c0_3 = arith.constant 0 : index
    %c0_4 = arith.constant 0 : index
    %3 = vector.load %arg3[%c0_3, %c0_4] : memref<8x1xf32, #tpu.memory_space<vmem>>, vector<8x1xf32>
    %4 = vector.broadcast %3 : vector<8x1xf32> to vector<8x128xf32>
    %5 = arith.addf %2, %4 : vector<8x128xf32>
    %cst_5 = arith.constant 0.000000e+00 : f32
    %6 = vector.broadcast %cst_5 : f32 to vector<8x128xf32>
    %7 = arith.maximumf %5, %6 : vector<8x128xf32>
    %8 = arith.truncf %7 : vector<8x128xf32> to vector<8x128xbf16>
    %c0_6 = arith.constant 0 : index
    %c0_7 = arith.constant 0 : index
    %9 = vector.load %arg4[%c0_6, %c0_7] : memref<8x128xbf16, #tpu.memory_space<vmem>>, vector<8x128xbf16>
    tpu.vector_store %arg4[%c0_6, %c0_7], %8 {strides = array<i32>} : memref<8x128xbf16, #tpu.memory_space<vmem>>, vector<8x128xbf16>,
    return
  }
  func.func @transform_0(%arg0: i32) -> (i32, i32) {
    %c0_i32 = arith.constant 0 : i32
    %c0_i32_0 = arith.constant 0 : i32
    return %c0_i32, %arg0 : i32, i32
  }
  func.func @transform_1(%arg0: i32) -> (i32, i32) {
    %c0_i32 = arith.constant 0 : i32
    %c0_i32_0 = arith.constant 0 : i32
    %c0_i32_1 = arith.constant 0 : i32
    return %c0_i32, %c0_i32_0 : i32, i32
  }
  func.func @transform_2(%arg0: i32) -> (i32, i32) {
    %c0_i32 = arith.constant 0 : i32
    %c0_i32_0 = arith.constant 0 : i32
    %c0_i32_1 = arith.constant 0 : i32
    return %c0_i32, %c0_i32_0 : i32, i32
  }
  func.func @transform_3(%arg0: i32) -> (i32, i32) {
    %c0_i32 = arith.constant 0 : i32
    %c0_i32_0 = arith.constant 0 : i32
    return %c0_i32, %arg0 : i32, i32
  }
}

</mosaic_0001>

<llo_original>
// kernel: tpu_custom_call.1
$region0: #{tpu_custom_call.1}
  #allocation0 [shape = 'u32[]', space=smem, size = 0x4, offset = 0x4, fixed_abs, tag = 'smem constant byte address 0x4 - core index']
  #allocation1 [shape = 'u32[144,128]{1,0:T(1,128)}', space=vmem, size = 0x12000, scoped, tag = 'internal scratch']
  %s0 = inlined_call_operand.hbm [shape: bf16[48,128], index: 0, kind: input, shape index: {}]
  %s1 = inlined_call_operand.vmem [shape: bf16[8,48], index: 1, kind: input, shape index: {}]
  %s2 = inlined_call_operand.vmem [shape: f32[8,1], index: 2, kind: input, shape index: {}]
  %s3 = inlined_call_operand.hbm [shape: bf16[8,128], index: 3, kind: output, shape index: {}]
  %s4 = sld [smem:[#allocation0]]
  $region26: #{tpu_custom_call.1} parent=0
    _
  %s6 = ssub.s32 1, %s4
  %s7 = scalar_select 0, %s6, %s4
  $region1: #{tpu_custom_call.1} parent=0
    #allocation2 [shape = 'u8[12288]{0}', space=vmem, size = 0x3000, scoped, tag = 'input window, operand 0, single buffered']
    #allocation3 [shape = 's32[1]{0}', space=sflag, size = 0x4, scoped, tag = 'scoped memory for tpu_custom_call.1']
    #allocation4 [shape = 's32[1]{0}', space=sflag, size = 0x4, scoped, tag = 'scoped memory for tpu_custom_call.1']
    #allocation5 [shape = 'u8[2048]{0}', space=vmem, size = 0x800, scoped, tag = 'output window, operand 0, single buffered']
    %8 = vsyncpa [#allocation3], 0
    %9 = vsyncpa [#allocation4], 0
    // Predicated region
    $region2: #{tpu_custom_call.1} parent=1 // pred_check
      _
    $region3: #{tpu_custom_call.1} parent=1 // pred_check_branch
      %11 = sbr.rel (0) target = $region5
    $region4: #{tpu_custom_call.1} parent=1 // pred_region
      %s13 = ssub.s32 384, 384
      %14 = vsyncadd [#allocation3], %s13
      %s15 = sshll.u32 [#allocation2], 4
      %s16 = int_to_ptr.vmem [resolvable:$true] %s15
      %21 = dma.hbm_to_vmem [thread:$0]  %s0, 384, %s16, [#allocation3], 64, 64, 4
    $region5: #{tpu_custom_call.1} parent=1 // pred_fallthru
      _
    // Predicated region
    $region6: #{tpu_custom_call.1} parent=1 // pred_check
      _
    $region7: #{tpu_custom_call.1} parent=1 // pred_check_branch
      %23 = sbr.rel (0) target = $region9
    $region8: #{tpu_custom_call.1} parent=1 // pred_region
      _
    $region9: #{tpu_custom_call.1} parent=1 // pred_fallthru
      _
    // Predicated region
    $region10: #{tpu_custom_call.1} parent=1 // pred_check
      _
    $region11: #{tpu_custom_call.1} parent=1 // pred_check_branch
      %25 = sbr.rel (0) target = $region13
    $region12: #{tpu_custom_call.1} parent=1 // pred_region
      _
    $region13: #{tpu_custom_call.1} parent=1 // pred_fallthru
      _
    // Predicated region
    $region14: #{tpu_custom_call.1} parent=1 // pred_check
      _
    $region15: #{tpu_custom_call.1} parent=1 // pred_check_branch
      %27 = sbr.rel (0) target = $region17
    $region16: #{tpu_custom_call.1} parent=1 // pred_region
      %28 = dma.done [#allocation3], 384
    $region17: #{tpu_custom_call.1} parent=1 // pred_fallthru
      _
    %v30 = vld [vmem:[%s1] sm:$0xf]
    %v31 = vld [vmem:[#allocation2] sm:$0xf]
    %v32 = vld [vmem:[#allocation2 + $0x4] sm:$0xf]
    %v33 = vld [vmem:[#allocation2 + $0x8] sm:$0xf]
    %v34 = vld [vmem:[#allocation2 + $0xc] sm:$0xf]
    %v35 = vld [vmem:[#allocation2 + $0x10] sm:$0xf]
    %v36 = vld [vmem:[#allocation2 + $0x14] sm:$0xf]
    %v37 = vld [vmem:[%s2] sm:$0xff]
    %39 = vset.pattern.permute.xlu0 0
    %40 = vperm.xlu0 %39, %v37
    %v41 = vpop.permute.xlu0 %40
    %v49 = vunpack.c.l.b16 %v31
    %v50 = vunpack.c.l.b16 %v32
    %v51 = vunpack.c.l.b16 %v33
    %v52 = vunpack.c.l.b16 %v34
    %v53 = vunpack.c.l.b16 %v35
    %v54 = vunpack.c.l.b16 %v36
    %v55 = vpack.c.b16 %v50, %v49
    %v56 = vpack.c.b16 %v52, %v51
    %v57 = vpack.c.b16 %v54, %v53
    %vm61 = vcmask 392192
    %v63 = vsel %vm61, %v30, 0
    %65 = vmatprep.subr.bf16.mxu0 0
    %66 = vmatpush1.bf16.msra.mxu0 %v55
    %67 = vmatprep.subr.bf16.mxu0 0
    %68 = vmatpush1.bf16.msra.mxu0 %v56
    %69 = vmatprep.subr.bf16.mxu0 0
    %70 = vmatpush1.bf16.msra.mxu0 %v57
    %71 = vmatprep.subr.bf16.mxu0 0
    %72 = vmatpush1.bf16.msra.mxu0 0
    %73 = vmatprep.subr.bf16.mxu0 0
    %74 = vmatpush1.bf16.msra.mxu0 0
    %75 = vmatprep.subr.bf16.mxu0 0
    %76 = vmatpush1.bf16.msra.mxu0 0
    %77 = vmatprep.subr.bf16.mxu0 0
    %78 = vmatpush1.bf16.msra.mxu0 0
    %79 = vmatprep.subr.bf16.mxu0 0
    %80 = vmatpush1.bf16.msra.mxu0 0
    %81 = vmatprep.subr.bf16.mxu0 0
    %82 = vmatpush1.bf16.msra.mxu0 0
    %83 = vmatprep.subr.bf16.mxu0 0
    %84 = vmatpush1.bf16.msra.mxu0 0
    %85 = vmatprep.subr.bf16.mxu0 0
    %86 = vmatpush1.bf16.msra.mxu0 0
    %87 = vmatprep.subr.bf16.mxu0 0
    %88 = vmatpush1.bf16.msra.mxu0 0
    %89 = vmatprep.subr.bf16.mxu0 0
    %90 = vmatpush1.bf16.msra.mxu0 0
    %91 = vmatprep.subr.bf16.mxu0 0
    %92 = vmatpush1.bf16.msra.mxu0 0
    %93 = vmatprep.subr.bf16.mxu0 0
    %94 = vmatpush1.bf16.msra.mxu0 0
    %95 = vmatprep.subr.bf16.mxu0 0
    %96 = vmatpush1.bf16.msra.mxu0 0
    %97 = vmatprep.mubr.bf16.mxu0 0
    %98 = vmatmul.mubr.bf16.gmra.mrb[0].mxu0 %v63
    %v99 = vpop.f32.mrb[0].mxu0
    %v100 = vadd.f32 %v41, %v99
    %v101 = vpop.f32.mrb[0].mxu0
    %v102 = vpop.f32.mrb[0].mxu0
    %v103 = vpop.f32.mrb[0].mxu0
    %104 = vdwg.mxu0
    %v105 = vmax.f32 %v100, 0.0
    %v106 = vpack.c.bf16 %v105, %v105
    %107 = vst [vmem:[#allocation5] sm:$0xf] %v106
    // Predicated region
    $region18: #{tpu_custom_call.1} parent=1 // pred_check
      _
    $region19: #{tpu_custom_call.1} parent=1 // pred_check_branch
      %109 = sbr.rel (0) target = $region21
    $region20: #{tpu_custom_call.1} parent=1 // pred_region
      %s111 = ssub.s32 64, 64
      %112 = vsyncadd [#allocation4], %s111
      %s114 = sshll.u32 [#allocation5], 4
      %s115 = int_to_ptr.vmem [resolvable:$true] %s114
      %117 = dma.vmem_to_hbm [thread:$0]  %s115, 64, %s3, [#allocation4]
    $region21: #{tpu_custom_call.1} parent=1 // pred_fallthru
      _
    // Predicated region
    $region22: #{tpu_custom_call.1} parent=1 // pred_check
      _
    $region23: #{tpu_custom_call.1} parent=1 // pred_check_branch
      %119 = sbr.rel (0) target = $region25
    $region24: #{tpu_custom_call.1} parent=1 // pred_region
      %120 = dma.done [#allocation4], 64
    $region25: #{tpu_custom_call.1} parent=1 // pred_fallthru
      _
    %121 = vsyncpa [#allocation3], 1
    %122 = vsyncpa [#allocation4], 1

</llo_original>
